<compile_context>
chip_gen: v7x
topology: tpu7x:2x2x1
jax: 0.10.0
libtpu: 0.0.40
codegen_flags: <defaults>
</compile_context>

<pallas_src>
import jax
import jax.numpy as jnp
from jax.experimental import pallas as pl
from jax.experimental.pallas import tpu as pltpu

# Polynomial coefficients (same as the PyTorch module's global `polyCoefficient`).
POLY_C0 = 0.0                    # dead term (kept for documentation)
POLY_C1 = 0.500000000000345
POLY_C2 = 0.000445951593435763

_LANE_CANDIDATES = (1024, 512, 256, 128)   # lane-dense widths (multiples of 128)


def _poly_relu_kernel(x_ref, o_ref):
    x = x_ref[...].astype(jnp.float32)
    # Horner form of c0 + c1*x + c2*x^2 with c0 == 0.
    o_ref[...] = (x * (POLY_C1 + POLY_C2 * x)).astype(o_ref.dtype)


def _target_block_bytes():
    """Per-generation per-buffer VMEM block budget."""
    try:
        kind = jax.devices()[0].device_kind.lower()
    except Exception:
        kind = ""
    # v5e scoped-VMEM default is 16 MiB -> 2 MiB blocks (4 live buffers = 8 MiB).
    # v6e/v7x: 4 MiB blocks (16 MiB live) fit the 32 MiB scoped default.
    return (2 << 20) if "v5" in kind else (4 << 20)


def poly_relu(x):
    """Elementwise polynomial 'ReLU'. Accepts any shape; returns same shape/dtype."""
    orig_shape = x.shape
    orig_dtype = x.dtype
    total = x.size
    itemsize = jnp.dtype(orig_dtype).itemsize

    # Pick a lane-dense slab width that divides the flat size exactly, so no
    # jnp.pad / trailing-slice full-tensor copies are ever needed.
    lane = next((l for l in _LANE_CANDIDATES if total > 0 and total % l == 0), None)
    if lane is None:
        # TODO(synk): ragged sizes (total % 128 != 0, or empty) use plain jnp
        # (same 2N HBM traffic as the kernel) instead of pad+slice copies.
        xf = x.astype(jnp.float32)
        return (xf * (POLY_C1 + POLY_C2 * xf)).astype(orig_dtype)

    rows = total // lane
    x2d = x.reshape(rows, lane)

    # Sublane alignment for the packed dtype: f32 -> 8, bf16 -> 16, int8 -> 32.
    row_align = 8 * max(1, 4 // itemsize)

    # Block rows sized so one buffer is ~2-4 MiB regardless of dtype / lane width.
    rows_per_block = max(
        row_align,
        (_target_block_bytes() // (lane * itemsize)) // row_align * row_align)

    if rows <= row_align:
        # Single full-array block (block_shape == array shape is always legal).
        tile_rows = rows
    else:
        # Guarantee >= 2 grid steps so v7x's two TensorCores both get work
        # (the "parallel" grid axis is sharded across cores).
        half = (rows + 1) // 2
        half_aligned = ((half + row_align - 1) // row_align) * row_align
        tile_rows = max(row_align, min(rows_per_block, half_aligned))

    grid_r = pl.cdiv(rows, tile_rows)

    out2d = pl.pallas_call(
        _poly_relu_kernel,
        out_shape=jax.ShapeDtypeStruct((rows, lane), orig_dtype),
        grid=(grid_r,),
        in_specs=[pl.BlockSpec((tile_rows, lane), lambda i: (i, 0))],
        out_specs=pl.BlockSpec((tile_rows, lane), lambda i: (i, 0)),
        compiler_params=pltpu.CompilerParams(
            dimension_semantics=("parallel",)),
        cost_estimate=pl.CostEstimate(
            flops=3 * total,
            transcendentals=0,
            bytes_accessed=2 * total * itemsize),
    )(x2d)

    return out2d.reshape(orig_shape)


def poly_relu_ref(x):
    xf = x.astype(jnp.float32)
    return (POLY_C0 + POLY_C1 * xf + POLY_C2 * xf * xf).astype(x.dtype)


if __name__ == "__main__":
    key = jax.random.PRNGKey(0)
    # NCHW input, small shapes: batch=2, channels=4, spatial=16x16
    x = jax.random.normal(key, (2, 4, 16, 16), dtype=jnp.float32)

    out = poly_relu(x)
    jax.block_until_ready(out)

    ref = poly_relu_ref(x)
    assert out.shape == x.shape and out.dtype == x.dtype
    assert jnp.allclose(out, ref, atol=1e-6, rtol=1e-6), "mismatch vs reference"

    print("KERNEL_OK")
</pallas_src>

<mosaic_0001>
module attributes {stable_mosaic.version = 11 : i64} {
  func.func @_poly_relu_kernel(%arg0: i32, %arg1: memref<2x1024xf32, #tpu.memory_space<vmem>>, %arg2: memref<2x1024xf32, #tpu.memory_space<vmem>>) attributes {dimension_semantics = [#tpu.dimension_semantics<parallel>], iteration_bounds = array<i64: 1>, scalar_prefetch = 0 : i64, scratch_operands = 0 : i64, tpu.core_type = #tpu.core_type<tc>, window_params = [{transform_indices = @transform_0, window_bounds = array<i64: 2, 1024>}, {transform_indices = @transform_1, window_bounds = array<i64: 2, 1024>}]} {
    %c0 = arith.constant 0 : index
    %c0_0 = arith.constant 0 : index
    %0 = vector.load %arg1[%c0, %c0_0] : memref<2x1024xf32, #tpu.memory_space<vmem>>, vector<2x1024xf32>
    %cst = arith.constant 4.45951591E-4 : f32
    %1 = vector.broadcast %cst : f32 to vector<2x1024xf32>
    %2 = arith.mulf %1, %0 : vector<2x1024xf32>
    %cst_1 = arith.constant 5.000000e-01 : f32
    %3 = vector.broadcast %cst_1 : f32 to vector<2x1024xf32>
    %4 = arith.addf %3, %2 : vector<2x1024xf32>
    %5 = arith.mulf %0, %4 : vector<2x1024xf32>
    %c0_2 = arith.constant 0 : index
    %c0_3 = arith.constant 0 : index
    %6 = vector.load %arg2[%c0_2, %c0_3] : memref<2x1024xf32, #tpu.memory_space<vmem>>, vector<2x1024xf32>
    tpu.vector_store %arg2[%c0_2, %c0_3], %5 {strides = array<i32>} : memref<2x1024xf32, #tpu.memory_space<vmem>>, vector<2x1024xf32>,
    return
  }
  func.func @transform_0(%arg0: i32) -> (i32, i32) {
    %c0_i32 = arith.constant 0 : i32
    %c0_i32_0 = arith.constant 0 : i32
    return %arg0, %c0_i32 : i32, i32
  }
  func.func @transform_1(%arg0: i32) -> (i32, i32) {
    %c0_i32 = arith.constant 0 : i32
    %c0_i32_0 = arith.constant 0 : i32
    return %arg0, %c0_i32 : i32, i32
  }
}

</mosaic_0001>

<llo_original>
// kernel: tpu_custom_call.1
$region0: #{tpu_custom_call.1}
  #allocation0 [shape = 'u32[]', space=smem, size = 0x4, offset = 0x4, fixed_abs, tag = 'smem constant byte address 0x4 - core index']
  #allocation1 [shape = 'u32[144,128]{1,0:T(1,128)}', space=vmem, size = 0x12000, scoped, tag = 'internal scratch']
  %s0 = inlined_call_operand.hbm [shape: f32[2,1024], index: 0, kind: input, shape index: {}]
  %s1 = inlined_call_operand.hbm [shape: f32[2,1024], index: 1, kind: output, shape index: {}]
  %s2 = sld [smem:[#allocation0]]
  $region18: #{tpu_custom_call.1} parent=0
    _
  %s4 = ssub.s32 1, %s2
  %s5 = scalar_select 0, %s4, %s2
  $region1: #{tpu_custom_call.1} parent=0
    #allocation2 [shape = 'u8[8192]{0}', space=vmem, size = 0x2000, scoped, tag = 'input window, operand 0, single buffered']
    #allocation3 [shape = 's32[1]{0}', space=sflag, size = 0x4, scoped, tag = 'scoped memory for tpu_custom_call.1']
    #allocation4 [shape = 's32[1]{0}', space=sflag, size = 0x4, scoped, tag = 'scoped memory for tpu_custom_call.1']
    #allocation5 [shape = 'u8[8192]{0}', space=vmem, size = 0x2000, scoped, tag = 'output window, operand 0, single buffered']
    %6 = vsyncpa [#allocation3], 0
    %7 = vsyncpa [#allocation4], 0
    // Predicated region
    $region2: #{tpu_custom_call.1} parent=1 // pred_check
      _
    $region3: #{tpu_custom_call.1} parent=1 // pred_check_branch
      %9 = sbr.rel (0) target = $region5
    $region4: #{tpu_custom_call.1} parent=1 // pred_region
      %s11 = ssub.s32 256, 256
      %12 = vsyncadd [#allocation3], %s11
      %s14 = sshll.u32 [#allocation2], 4
      %s15 = int_to_ptr.vmem [resolvable:$true] %s14
      %17 = dma.hbm_to_vmem [thread:$0]  %s0, 256, %s15, [#allocation3]
    $region5: #{tpu_custom_call.1} parent=1 // pred_fallthru
      _
    // Predicated region
    $region6: #{tpu_custom_call.1} parent=1 // pred_check
      _
    $region7: #{tpu_custom_call.1} parent=1 // pred_check_branch
      %19 = sbr.rel (0) target = $region9
    $region8: #{tpu_custom_call.1} parent=1 // pred_region
      %20 = dma.done [#allocation3], 256
    $region9: #{tpu_custom_call.1} parent=1 // pred_fallthru
      _
    %v21 = vld [vmem:[#allocation2] sm:$0xff]
    %v22 = vld [vmem:[#allocation2 + $0x8] sm:$0xff]
    %v23 = vmul.f32 %v21, 0.0004459516
    %v24 = vmul.f32 %v22, 0.0004459516
    %v25 = vadd.f32 %v23, 0.5
    %v26 = vadd.f32 %v24, 0.5
    %v27 = vmul.f32 %v21, %v25
    %v28 = vmul.f32 %v22, %v26
    %29 = vst [vmem:[#allocation5] sm:$0xff] %v27
    %30 = vst [vmem:[#allocation5 + $0x8] sm:$0xff] %v28
    // Predicated region
    $region10: #{tpu_custom_call.1} parent=1 // pred_check
      _
    $region11: #{tpu_custom_call.1} parent=1 // pred_check_branch
      %32 = sbr.rel (0) target = $region13
    $region12: #{tpu_custom_call.1} parent=1 // pred_region
      %s34 = ssub.s32 256, 256
      %35 = vsyncadd [#allocation4], %s34
      %s37 = sshll.u32 [#allocation5], 4
      %s38 = int_to_ptr.vmem [resolvable:$true] %s37
      %40 = dma.vmem_to_hbm [thread:$0]  %s38, 256, %s1, [#allocation4]
    $region13: #{tpu_custom_call.1} parent=1 // pred_fallthru
      _
    // Predicated region
    $region14: #{tpu_custom_call.1} parent=1 // pred_check
      _
    $region15: #{tpu_custom_call.1} parent=1 // pred_check_branch
      %42 = sbr.rel (0) target = $region17
    $region16: #{tpu_custom_call.1} parent=1 // pred_region
      %43 = dma.done [#allocation4], 256
    $region17: #{tpu_custom_call.1} parent=1 // pred_fallthru
      _
    %44 = vsyncpa [#allocation3], 1
    %45 = vsyncpa [#allocation4], 1

</llo_original>
